<compile_context>
chip_gen: v5e
topology: v5e:2x2
jax: 0.10.0
libtpu: 0.0.40
codegen_flags: <defaults>
</compile_context>

<pallas_src>
import functools

import jax
import jax.numpy as jnp
from jax import lax
from jax.experimental import pallas as pl
from jax.experimental.pallas import tpu as pltpu


# ---- Packed parameter slab layout -------------------------------------------
# Layer l (PyTorch Linear l+1) lives in its own 128-lane panel of the slab:
#   rows [0:out_l], lanes [128*l : 128*l + in_l]  -> W_l  (out_l, in_l)
#   rows [0:out_l], lane   128*l + in_l           -> b_l  (out_l,)
_IN_DIMS = (4, 10, 6, 3)
_OUT_DIMS = (10, 6, 3, 1)
_LANE_OFF = (0, 128, 256, 384)
_PACK_SHAPE = (16, 512)            # one 32 KiB f32 slab


def _sigmoid(z):
    # sigmoid(z) = 0.5 * tanh(z/2) + 0.5 : single EUP push per vreg, exact.
    return 0.5 * jnp.tanh(0.5 * z) + 0.5


def mlp_kernel(p_ref, x_ref, o_ref, *, sub, n_sub):
    # p_ref: (16, 512) packed params (grid-invariant).
    # x_ref: (tb, 4) batch-major rows.  o_ref: (1, tb) lane-dense output.
    # Hoist the tiny, vreg-aligned weight/bias loads out of the chunk loop.
    ws, bs = [], []
    for l in range(4):
        cin, cout, c0 = _IN_DIMS[l], _OUT_DIMS[l], _LANE_OFF[l]
        ws.append(p_ref[0:cout, c0:c0 + cin])            # (out, in), aligned
        bs.append(p_ref[0:cout, c0 + cin:c0 + cin + 1])  # (out, 1) lane-broadcast

    def compute(xc):
        # xc: (m, 4) rows.  Layer 1 contracts the feature axis of BOTH
        # operands (w @ x.T, the q@k.T MXU pattern) -> (10, m): batch lands
        # on lanes, so all later layers / the store are lane-dense.
        z = lax.dot_general(ws[0], xc, (((1,), (1,)), ((), ())),
                            preferred_element_type=jnp.float32) + bs[0]
        h = _sigmoid(z)
        for l in range(1, 4):
            z = jnp.dot(ws[l], h, preferred_element_type=jnp.float32) + bs[l]
            h = _sigmoid(z)
        return h                                          # (1, m)

    if n_sub == 1:
        o_ref[...] = compute(x_ref[...]).astype(o_ref.dtype)
    else:
        def body(j, carry):
            j0 = pl.multiple_of(j * sub, sub)
            xc = x_ref[pl.ds(j0, sub), :]                 # (sub, 4)
            o_ref[:, pl.ds(j0, sub)] = compute(xc).astype(o_ref.dtype)
            return carry
        lax.fori_loop(0, n_sub, body, 0, unroll=2)


@functools.partial(jax.jit, static_argnames=("block_b", "sub_b"))
def mlp_forward(x, packed_params, block_b=4096, sub_b=256):
    """x: (B, 4) float32 (PyTorch layout).  Returns (B, 1)."""
    B, F = x.shape
    assert F == _IN_DIMS[0]
    x = x.astype(jnp.float32)

    if B < sub_b:
        sub, n_sub = B, 1          # one tiny chunk covers the whole batch
    else:
        sub = sub_b
        n_chunks = pl.cdiv(B, sub)
        # Per-step tile: as big as block_b allows, but keep >= 2 grid steps
        # when the batch is large enough (v7x megacore sharding).
        n_sub = min(block_b // sub, max(1, pl.cdiv(n_chunks, 2)))
    tb = sub * n_sub
    grid = pl.cdiv(B, tb)
    b_tot = grid * tb              # padded output lanes, sliced off below

    kernel = functools.partial(mlp_kernel, sub=sub, n_sub=n_sub)
    out = pl.pallas_call(
        kernel,
        out_shape=jax.ShapeDtypeStruct((1, b_tot), jnp.float32),
        grid_spec=pltpu.PrefetchScalarGridSpec(
            num_scalar_prefetch=0,
            grid=(grid,),
            in_specs=[
                # Grid-invariant packed params: constant block index -> one DMA.
                pl.BlockSpec(_PACK_SHAPE, lambda i: (0, 0)),
                # Contiguous row-tile of x in its native (B, 4) layout.
                pl.BlockSpec((tb, F), lambda i: (i, 0)),
            ],
            out_specs=pl.BlockSpec((1, tb), lambda i: (0, i)),
        ),
        compiler_params=pltpu.CompilerParams(
            dimension_semantics=("parallel",)),   # megacore split over batch tiles
    )(packed_params, x)

    # (1, b_tot) lane-dense -> (B, 1); lanes >= B (partial last block) dropped.
    return out[0, :B][:, None]


def init_params(key):
    """nn.Linear-style init: W (out, in), b (out,), U[-1/sqrt(fan_in), +...]."""
    dims = [(4, 10), (10, 6), (6, 3), (3, 1)]
    params = []
    for fan_in, fan_out in dims:
        key, kw, kb = jax.random.split(key, 3)
        bound = 1.0 / float(fan_in) ** 0.5
        w = jax.random.uniform(kw, (fan_out, fan_in), jnp.float32,
                               minval=-bound, maxval=bound)
        b = jax.random.uniform(kb, (fan_out,), jnp.float32,
                               minval=-bound, maxval=bound)
        params.extend([w, b])
    return tuple(params)


def pack_params(params):
    """Pack the 8 weight/bias arrays into one (16, 512) f32 slab, 128-lane aligned."""
    P = jnp.zeros(_PACK_SHAPE, jnp.float32)
    for l in range(4):
        w, b = params[2 * l], params[2 * l + 1]
        cin, cout, c0 = _IN_DIMS[l], _OUT_DIMS[l], _LANE_OFF[l]
        P = P.at[0:cout, c0:c0 + cin].set(w)
        P = P.at[0:cout, c0 + cin].set(b)
    return P


def mlp_reference(x, params):
    h = x
    for l in range(4):
        w, b = params[2 * l], params[2 * l + 1]
        h = jax.nn.sigmoid(h @ w.T + b)
    return h


if __name__ == "__main__":
    key = jax.random.PRNGKey(0)
    key, kx = jax.random.split(key)

    B = 16
    x = jax.random.normal(kx, (B, 4), jnp.float32)
    params = init_params(key)
    packed = pack_params(params)

    y = mlp_forward(x, packed)
    jax.block_until_ready(y)

    y_ref = mlp_reference(x, params)
    assert y.shape == (B, 1)
    # Tolerance covers MXU default-precision matmul differences vs the XLA
    # reference; the tanh-based sigmoid itself is exact.
    err = float(jnp.max(jnp.abs(y - y_ref)))
    assert jnp.allclose(y, y_ref, atol=1e-3, rtol=1e-3), err

    print("KERNEL_OK")
</pallas_src>

<mosaic_0001>
module attributes {stable_mosaic.version = 11 : i64} {
  func.func @mlp_kernel(%arg0: i32, %arg1: memref<16x512xf32, #tpu.memory_space<vmem>>, %arg2: memref<16x4xf32, #tpu.memory_space<vmem>>, %arg3: memref<1x16xf32, #tpu.memory_space<vmem>>) attributes {dimension_semantics = [#tpu.dimension_semantics<parallel>], iteration_bounds = array<i64: 1>, scalar_prefetch = 0 : i64, scratch_operands = 0 : i64, tpu.core_type = #tpu.core_type<tc>, window_params = [{pipeline_mode = #tpu.pipeline_mode<synchronous>, transform_indices = @transform_0, window_bounds = array<i64: 16, 512>}, {transform_indices = @transform_1, window_bounds = array<i64: 16, 4>}, {transform_indices = @transform_2, window_bounds = array<i64: 1, 16>}]} {
    %c0 = arith.constant 0 : index
    %c0_0 = arith.constant 0 : index
    %0 = vector.load %arg1[%c0, %c0_0] : memref<16x512xf32, #tpu.memory_space<vmem>>, vector<10x4xf32>
    %c0_1 = arith.constant 0 : index
    %c4 = arith.constant 4 : index
    %1 = vector.load %arg1[%c0_1, %c4] : memref<16x512xf32, #tpu.memory_space<vmem>>, vector<10x1xf32>
    %c0_2 = arith.constant 0 : index
    %c128 = arith.constant 128 : index
    %2 = vector.load %arg1[%c0_2, %c128] : memref<16x512xf32, #tpu.memory_space<vmem>>, vector<6x10xf32>
    %c0_3 = arith.constant 0 : index
    %c138 = arith.constant 138 : index
    %3 = vector.load %arg1[%c0_3, %c138] : memref<16x512xf32, #tpu.memory_space<vmem>>, vector<6x1xf32>
    %c0_4 = arith.constant 0 : index
    %c256 = arith.constant 256 : index
    %4 = vector.load %arg1[%c0_4, %c256] : memref<16x512xf32, #tpu.memory_space<vmem>>, vector<3x6xf32>
    %c0_5 = arith.constant 0 : index
    %c262 = arith.constant 262 : index
    %5 = vector.load %arg1[%c0_5, %c262] : memref<16x512xf32, #tpu.memory_space<vmem>>, vector<3x1xf32>
    %c0_6 = arith.constant 0 : index
    %c384 = arith.constant 384 : index
    %6 = vector.load %arg1[%c0_6, %c384] : memref<16x512xf32, #tpu.memory_space<vmem>>, vector<1x3xf32>
    %c0_7 = arith.constant 0 : index
    %c387 = arith.constant 387 : index
    %7 = vector.load %arg1[%c0_7, %c387] : memref<16x512xf32, #tpu.memory_space<vmem>>, vector<1x1xf32>
    %c0_8 = arith.constant 0 : index
    %c0_9 = arith.constant 0 : index
    %8 = vector.load %arg2[%c0_8, %c0_9] : memref<16x4xf32, #tpu.memory_space<vmem>>, vector<16x4xf32>
    %cst = arith.constant dense<0.000000e+00> : vector<10x16xf32>
    %9 = tpu.matmul %0, %8, %cst {dimension_numbers = #tpu.dot_dimension_numbers<[1], [1], [0], [0], [0, 0, 1, 0], [], []>} : vector<10x4xf32>, vector<16x4xf32>, vector<10x16xf32> -> vector<10x16xf32>
    %10 = vector.broadcast %1 : vector<10x1xf32> to vector<10x16xf32>
    %11 = arith.addf %9, %10 : vector<10x16xf32>
    %cst_10 = arith.constant 5.000000e-01 : f32
    %12 = vector.broadcast %cst_10 : f32 to vector<10x16xf32>
    %13 = arith.mulf %12, %11 : vector<10x16xf32>
    %14 = math.tanh %13 : vector<10x16xf32>
    %cst_11 = arith.constant 5.000000e-01 : f32
    %15 = vector.broadcast %cst_11 : f32 to vector<10x16xf32>
    %16 = arith.mulf %15, %14 : vector<10x16xf32>
    %cst_12 = arith.constant 5.000000e-01 : f32
    %17 = vector.broadcast %cst_12 : f32 to vector<10x16xf32>
    %18 = arith.addf %16, %17 : vector<10x16xf32>
    %cst_13 = arith.constant dense<0.000000e+00> : vector<6x16xf32>
    %19 = tpu.matmul %2, %18, %cst_13 {dimension_numbers = #tpu.dot_dimension_numbers<[1], [0], [0], [1], [0, 0, 1, 1], [], []>} : vector<6x10xf32>, vector<10x16xf32>, vector<6x16xf32> -> vector<6x16xf32>
    %20 = vector.broadcast %3 : vector<6x1xf32> to vector<6x16xf32>
    %21 = arith.addf %19, %20 : vector<6x16xf32>
    %cst_14 = arith.constant 5.000000e-01 : f32
    %22 = vector.broadcast %cst_14 : f32 to vector<6x16xf32>
    %23 = arith.mulf %22, %21 : vector<6x16xf32>
    %24 = math.tanh %23 : vector<6x16xf32>
    %cst_15 = arith.constant 5.000000e-01 : f32
    %25 = vector.broadcast %cst_15 : f32 to vector<6x16xf32>
    %26 = arith.mulf %25, %24 : vector<6x16xf32>
    %cst_16 = arith.constant 5.000000e-01 : f32
    %27 = vector.broadcast %cst_16 : f32 to vector<6x16xf32>
    %28 = arith.addf %26, %27 : vector<6x16xf32>
    %cst_17 = arith.constant dense<0.000000e+00> : vector<3x16xf32>
    %29 = tpu.matmul %4, %28, %cst_17 {dimension_numbers = #tpu.dot_dimension_numbers<[1], [0], [0], [1], [0, 0, 1, 1], [], []>} : vector<3x6xf32>, vector<6x16xf32>, vector<3x16xf32> -> vector<3x16xf32>
    %30 = vector.broadcast %5 : vector<3x1xf32> to vector<3x16xf32>
    %31 = arith.addf %29, %30 : vector<3x16xf32>
    %cst_18 = arith.constant 5.000000e-01 : f32
    %32 = vector.broadcast %cst_18 : f32 to vector<3x16xf32>
    %33 = arith.mulf %32, %31 : vector<3x16xf32>
    %34 = math.tanh %33 : vector<3x16xf32>
    %cst_19 = arith.constant 5.000000e-01 : f32
    %35 = vector.broadcast %cst_19 : f32 to vector<3x16xf32>
    %36 = arith.mulf %35, %34 : vector<3x16xf32>
    %cst_20 = arith.constant 5.000000e-01 : f32
    %37 = vector.broadcast %cst_20 : f32 to vector<3x16xf32>
    %38 = arith.addf %36, %37 : vector<3x16xf32>
    %cst_21 = arith.constant dense<0.000000e+00> : vector<1x16xf32>
    %39 = tpu.matmul %6, %38, %cst_21 {dimension_numbers = #tpu.dot_dimension_numbers<[1], [0], [0], [1], [0, 0, 1, 1], [], []>} : vector<1x3xf32>, vector<3x16xf32>, vector<1x16xf32> -> vector<1x16xf32>
    %40 = vector.broadcast %7 : vector<1x1xf32> to vector<1x16xf32>
    %41 = arith.addf %39, %40 : vector<1x16xf32>
    %cst_22 = arith.constant 5.000000e-01 : f32
    %42 = vector.broadcast %cst_22 : f32 to vector<1x16xf32>
    %43 = arith.mulf %42, %41 : vector<1x16xf32>
    %44 = math.tanh %43 : vector<1x16xf32>
    %cst_23 = arith.constant 5.000000e-01 : f32
    %45 = vector.broadcast %cst_23 : f32 to vector<1x16xf32>
    %46 = arith.mulf %45, %44 : vector<1x16xf32>
    %cst_24 = arith.constant 5.000000e-01 : f32
    %47 = vector.broadcast %cst_24 : f32 to vector<1x16xf32>
    %48 = arith.addf %46, %47 : vector<1x16xf32>
    %c0_25 = arith.constant 0 : index
    %c0_26 = arith.constant 0 : index
    %49 = vector.load %arg3[%c0_25, %c0_26] : memref<1x16xf32, #tpu.memory_space<vmem>>, vector<1x16xf32>
    tpu.vector_store %arg3[%c0_25, %c0_26], %48 {strides = array<i32>} : memref<1x16xf32, #tpu.memory_space<vmem>>, vector<1x16xf32>,
    return
  }
  func.func @transform_0(%arg0: i32) -> (i32, i32) {
    %c0_i32 = arith.constant 0 : i32
    %c0_i32_0 = arith.constant 0 : i32
    %c0_i32_1 = arith.constant 0 : i32
    return %c0_i32, %c0_i32_0 : i32, i32
  }
  func.func @transform_1(%arg0: i32) -> (i32, i32) {
    %c0_i32 = arith.constant 0 : i32
    %c0_i32_0 = arith.constant 0 : i32
    return %arg0, %c0_i32 : i32, i32
  }
  func.func @transform_2(%arg0: i32) -> (i32, i32) {
    %c0_i32 = arith.constant 0 : i32
    %c0_i32_0 = arith.constant 0 : i32
    return %c0_i32, %arg0 : i32, i32
  }
}

</mosaic_0001>

<llo_original>
// kernel: mlp_forward.1
$region0: #{mlp_forward.1}
  #allocation0 [shape = 'u32[]', space=smem, size = 0x4, offset = 0x4, fixed_abs, tag = 'smem constant byte address 0x4 - core index']
  #allocation1 [shape = 'u32[72,128]{1,0:T(1,128)}', space=vmem, size = 0x9000, scoped, tag = 'internal scratch']
  %s0 = inlined_call_operand.hbm [shape: f32[16,512], index: 0, kind: input, shape index: {}]
  %s1 = inlined_call_operand.vmem [shape: f32[16,4], index: 1, kind: input, shape index: {}]
  %s2 = inlined_call_operand.hbm [shape: f32[1,16], index: 2, kind: output, shape index: {}]
  %s3 = sld [smem:[#allocation0]]
  $region22: #{mlp_forward.1} parent=0
    _
  %s5 = ssub.s32 1, %s3
  %s6 = scalar_select 0, %s5, %s3
  $region1: #{mlp_forward.1} parent=0
    #allocation2 [shape = 'u8[32768]{0}', space=vmem, size = 0x8000, scoped, tag = 'input window, operand 0, single buffered']
    #allocation3 [shape = 's32[1]{0}', space=sflag, size = 0x4, scoped, tag = 'scoped memory for mlp_forward.1']
    #allocation4 [shape = 's32[1]{0}', space=sflag, size = 0x4, scoped, tag = 'scoped memory for mlp_forward.1']
    #allocation5 [shape = 'u8[512]{0}', space=vmem, size = 0x400, scoped, tag = 'output window, operand 0, single buffered']
    %7 = vsyncpa [#allocation3], 0
    %8 = vsyncpa [#allocation4], 0
    // Predicated region
    $region2: #{mlp_forward.1} parent=1 // pred_check
      _
    $region3: #{mlp_forward.1} parent=1 // pred_check_branch
      %10 = sbr.rel (0) target = $region5
    $region4: #{mlp_forward.1} parent=1 // pred_region
      %12 = vsyncadd [#allocation3], 0
      %s13 = sshll.u32 %s0, 4
      %s14 = int_to_ptr.hbm [resolvable:$true] %s13
      %s15 = sshll.u32 [#allocation2], 4
      %s16 = int_to_ptr.vmem [resolvable:$true] %s15
      %21 = dma.hbm_to_vmem [thread:$0]  %s14, 1024, %s16, [#allocation3], 512, 512, 32
    $region5: #{mlp_forward.1} parent=1 // pred_fallthru
      _
    // Predicated region
    $region6: #{mlp_forward.1} parent=1 // pred_check
      _
    $region7: #{mlp_forward.1} parent=1 // pred_check_branch
      %23 = sbr.rel (0) target = $region9
    $region8: #{mlp_forward.1} parent=1 // pred_region
      _
    $region9: #{mlp_forward.1} parent=1 // pred_fallthru
      _
    // Predicated region
    $region10: #{mlp_forward.1} parent=1 // pred_check
      _
    $region11: #{mlp_forward.1} parent=1 // pred_check_branch
      %25 = sbr.rel (0) target = $region13
    $region12: #{mlp_forward.1} parent=1 // pred_region
      %27 = dma.done [#allocation3], 1024
    $region13: #{mlp_forward.1} parent=1 // pred_fallthru
      _
    %v28 = vld [vmem:[#allocation2] sm:$0xff]
    %v29 = vld [vmem:[#allocation2 + $0x20] sm:$0x3]
    %v30 = vld [vmem:[#allocation2 + $0x8] sm:$0x3f]
    %v31 = vld [vmem:[#allocation2 + $0x10] sm:$0x7]
    %v32 = vld [vmem:[#allocation2 + $0x18] ss:$0 sm:$0xff]
    %v33 = vld [vmem:[%s1] sm:$0xff]
    %v34 = vld [vmem:[%s1 + $0x8] sm:$0xff]
    %36 = vset.pattern.permute.xlu0 4
    %37 = vperm.xlu0 %36, %v28
    %v38 = vpop.permute.xlu0 %37
    %41 = vset.pattern.permute.xlu0 4
    %42 = vperm.xlu0 %41, %v29
    %v43 = vpop.permute.xlu0 %42
    %vm45 = vcmask 31744
    %v46 = vsel %vm45, %v28, 0
    %v48 = vsel %vm45, %v29, 0
    %v51 = vsel %vm45, %v33, 0
    %v54 = vsel %vm45, %v34, 0
    %56 = vmatpush.xpose.msra.mxu0 0.0
    %57 = vmatpush.xpose.msra.mxu0 0.0
    %58 = vmatpush.xpose.msra.mxu0 0.0
    %59 = vmatpush.xpose.msra.mxu0 0.0
    %60 = vmatpush.xpose.msra.mxu0 0.0
    %61 = vmatpush.xpose.msra.mxu0 0.0
    %62 = vmatpush.xpose.msra.mxu0 0.0
    %63 = vmatpush.xpose.msra.mxu0 0.0
    %64 = vmatpush.xpose.msra.mxu0 0.0
    %65 = vmatpush.xpose.msra.mxu0 0.0
    %66 = vmatpush.xpose.msra.mxu0 0.0
    %67 = vmatpush.xpose.msra.mxu0 0.0
    %68 = vmatpush.xpose.msra.mxu0 0.0
    %69 = vmatpush.xpose.msra.mxu0 0.0
    %70 = vmatpush.xpose.msra.mxu0 %v54
    %71 = vmatpush.xpose.msra.mxu0 %v51
    %72 = vmatmul.f32.gmra.mxu0 %v46
    %v73 = vpop.f32.mrf.mxu0
    %v74 = vadd.f32 %v38, %v73
    %75 = vmatmul.f32.gmra.mxu0 %v48
    %v76 = vpop.f32.mrf.mxu0
    %v77 = vadd.f32 %v43, %v76
    %78 = vdwg.mxu0
    %v79 = vmul.f32 %v74, 0.5
    %v80 = vmul.f32 %v77, 0.5
    %v81 = vtanh.pop %v79
    %v82 = vtanh.pop %v80
    %v83 = vmul.f32 %v81, 0.5
    %v84 = vmul.f32 %v82, 0.5
    %v85 = vadd.f32 %v83, 0.5
    %v86 = vadd.f32 %v84, 0.5
    %88 = vset.pattern.permute.xlu0 10
    %89 = vperm.xlu0 %88, %v30
    %v90 = vpop.permute.xlu0 %89
    %vm92 = vcmask 80896
    %v93 = vsel %vm92, %v30, 0
    %vm95 = vcmask 1041408
    %v97 = vsel %vm95, %v86, 0
    %99 = vmatpush.msra.mxu0 0.0
    %100 = vmatpush.msra.mxu0 0.0
    %101 = vmatpush.msra.mxu0 0.0
    %102 = vmatpush.msra.mxu0 0.0
    %103 = vmatpush.msra.mxu0 0.0
    %104 = vmatpush.msra.mxu0 0.0
    %105 = vmatpush.msra.mxu0 0.0
    %106 = vmatpush.msra.mxu0 0.0
    %107 = vmatpush.msra.mxu0 0.0
    %108 = vmatpush.msra.mxu0 0.0
    %109 = vmatpush.msra.mxu0 0.0
    %110 = vmatpush.msra.mxu0 0.0
    %111 = vmatpush.msra.mxu0 0.0
    %112 = vmatpush.msra.mxu0 0.0
    %113 = vmatpush.msra.mxu0 %v97
    %114 = vmatpush.msra.mxu0 %v85
    %115 = vmatmul.f32.gmra.mxu0 %v93
    %v116 = vpop.f32.mrf.mxu0
    %v117 = vadd.f32 %v90, %v116
    %118 = vdwg.mxu0
    %v119 = vmul.f32 %v117, 0.5
    %v120 = vtanh.pop %v119
    %v121 = vmul.f32 %v120, 0.5
    %v122 = vadd.f32 %v121, 0.5
    %124 = vset.pattern.permute.xlu0 6
    %125 = vperm.xlu0 %124, %v31
    %v126 = vpop.permute.xlu0 %125
    %vm128 = vcmask 48128
    %v129 = vsel %vm128, %v31, 0
    %vm131 = vcmask 1045504
    %v133 = vsel %vm131, %v122, 0
    %135 = vmatpush.msra.mxu0 0.0
    %136 = vmatpush.msra.mxu0 0.0
    %137 = vmatpush.msra.mxu0 0.0
    %138 = vmatpush.msra.mxu0 0.0
    %139 = vmatpush.msra.mxu0 0.0
    %140 = vmatpush.msra.mxu0 0.0
    %141 = vmatpush.msra.mxu0 0.0
    %142 = vmatpush.msra.mxu0 0.0
    %143 = vmatpush.msra.mxu0 0.0
    %144 = vmatpush.msra.mxu0 0.0
    %145 = vmatpush.msra.mxu0 0.0
    %146 = vmatpush.msra.mxu0 0.0
    %147 = vmatpush.msra.mxu0 0.0
    %148 = vmatpush.msra.mxu0 0.0
    %149 = vmatpush.msra.mxu0 0.0
    %150 = vmatpush.msra.mxu0 %v133
    %151 = vmatmul.f32.gmra.mxu0 %v129
    %v152 = vpop.f32.mrf.mxu0
    %v153 = vadd.f32 %v126, %v152
    %154 = vdwg.mxu0
    %v155 = vmul.f32 %v153, 0.5
    %v156 = vtanh.pop %v155
    %v157 = vmul.f32 %v156, 0.5
    %v158 = vadd.f32 %v157, 0.5
    %160 = vset.pattern.permute.xlu0 3
    %161 = vperm.xlu0 %160, %v32
    %v162 = vpop.permute.xlu0 %161
    %vm164 = vcmask 23552
    %v165 = vsel %vm164, %v32, 0
    %vm167 = vcmask 1042432
    %v169 = vsel %vm167, %v158, 0
    %171 = vmatpush.msra.mxu0 0.0
    %172 = vmatpush.msra.mxu0 0.0
    %173 = vmatpush.msra.mxu0 0.0
    %174 = vmatpush.msra.mxu0 0.0
    %175 = vmatpush.msra.mxu0 0.0
    %176 = vmatpush.msra.mxu0 0.0
    %177 = vmatpush.msra.mxu0 0.0
    %178 = vmatpush.msra.mxu0 0.0
    %179 = vmatpush.msra.mxu0 0.0
    %180 = vmatpush.msra.mxu0 0.0
    %181 = vmatpush.msra.mxu0 0.0
    %182 = vmatpush.msra.mxu0 0.0
    %183 = vmatpush.msra.mxu0 0.0
    %184 = vmatpush.msra.mxu0 0.0
    %185 = vmatpush.msra.mxu0 0.0
    %186 = vmatpush.msra.mxu0 %v169
    %187 = vmatmul.f32.gmra.mxu0 %v165
    %v188 = vpop.f32.mrf.mxu0
    %v189 = vadd.f32 %v162, %v188
    %190 = vdwg.mxu0
    %v191 = vmul.f32 %v189, 0.5
    %v192 = vtanh.pop %v191
    %v193 = vmul.f32 %v192, 0.5
    %v194 = vadd.f32 %v193, 0.5
    %vm195 = vcmask 122880
    %196 = vst.msk [vmem:[#allocation5] sm:$0x1] %vm195, %v194
    // Predicated region
    $region14: #{mlp_forward.1} parent=1 // pred_check
      _
    $region15: #{mlp_forward.1} parent=1 // pred_check_branch
      %198 = sbr.rel (0) target = $region17
    $region16: #{mlp_forward.1} parent=1 // pred_region
      %200 = vsyncadd [#allocation4], 0
      %s202 = sshll.u32 [#allocation5], 4
      %s203 = int_to_ptr.vmem [resolvable:$true] %s202
      %s204 = sshll.u32 %s2, 4
      %s205 = int_to_ptr.hbm [resolvable:$true] %s204
      %207 = dma.vmem_to_hbm [thread:$0]  %s203, 16, %s205, [#allocation4]
    $region17: #{mlp_forward.1} parent=1 // pred_fallthru
      _
    // Predicated region
    $region18: #{mlp_forward.1} parent=1 // pred_check
      _
    $region19: #{mlp_forward.1} parent=1 // pred_check_branch
      %209 = sbr.rel (0) target = $region21
    $region20: #{mlp_forward.1} parent=1 // pred_region
      %211 = dma.done [#allocation4], 16
    $region21: #{mlp_forward.1} parent=1 // pred_fallthru
      _
    %212 = vsyncpa [#allocation3], 1
    %213 = vsyncpa [#allocation4], 1

</llo_original>
